<compile_context>
chip_gen: v7x
topology: tpu7x:2x2x1
jax: 0.10.0
libtpu: 0.0.40
codegen_flags: <defaults>
</compile_context>

<pallas_src>
from typing import NamedTuple

import jax
import jax.numpy as jnp
from jax.experimental import pallas as pl
from jax.experimental.pallas import tpu as pltpu


def _round_up(n: int, m: int) -> int:
    return ((n + m - 1) // m) * m


def _tpu_vmem_bytes() -> int:
    """Physical VMEM bytes for the current generation (conservative fallback)."""
    try:
        return int(pltpu.get_tpu_info().vmem_capacity_bytes)
    except Exception:
        return 64 * 1024 * 1024  # v7x per-TC size; safe lower bound everywhere


class PreparedParams(NamedTuple):
    w1p: jax.Array   # (dp, hp)  bf16, lane-dense padded
    b1p: jax.Array   # (1, hp)   f32
    w2p: jax.Array   # (hp, dp)  bf16
    b2p: jax.Array   # (1, dp)   f32
    d: int
    d_hidden: int


def prepare_params(w1, b1, w2, b2) -> PreparedParams:
    """One-time (init-time) pad-to-128 + bf16 cast of the weights.

    Zero padding is exact: padded x-cols hit zero w1-rows, padded hidden units
    get bias 0 (relu(0)=0 contributes nothing), padded output cols come out 0.
    """
    d, d_hidden = w1.shape
    dp = _round_up(max(d, 128), 128)
    hp = _round_up(max(d_hidden, 128), 128)
    w1p = jnp.zeros((dp, hp), jnp.bfloat16).at[:d, :d_hidden].set(w1.astype(jnp.bfloat16))
    b1p = jnp.zeros((1, hp), jnp.float32).at[:, :d_hidden].set(
        jnp.reshape(b1, (1, -1)).astype(jnp.float32))
    w2p = jnp.zeros((hp, dp), jnp.bfloat16).at[:d_hidden, :d].set(w2.astype(jnp.bfloat16))
    b2p = jnp.zeros((1, dp), jnp.float32).at[:, :d].set(
        jnp.reshape(b2, (1, -1)).astype(jnp.float32))
    return PreparedParams(w1p, b1p, w2p, b2p, d, d_hidden)


def mlp_kernel(x_ref, w1_ref, b1_ref, w2_ref, b2_ref, o_ref, acc_ref):
    # Grid = (batch_tiles, hidden_tiles).  Per (i, k):
    #   x_ref:  (tb, dp)   input tile, native dtype (cast to bf16 here, on VPU)
    #   w1_ref: (dp, hk)   bf16 w1 hidden chunk
    #   b1_ref: (1, hk)    f32 bias chunk
    #   w2_ref: (hk, dp)   bf16 w2 hidden chunk
    #   b2_ref: (1, dp)    f32 output bias (constant block)
    #   o_ref:  (tb, dp)   output tile (written at last k)
    #   acc_ref:(tb, dp)   f32 accumulator scratch
    k = pl.program_id(1)

    @pl.when(k == 0)
    def _():
        acc_ref[...] = jnp.zeros_like(acc_ref)

    xb = x_ref[...].astype(jnp.bfloat16)                               # free-ish VPU cast
    h = jnp.dot(xb, w1_ref[...], preferred_element_type=jnp.float32)   # MXU
    h = jnp.maximum(h + b1_ref[...], 0.0)                              # f32 VPU bias + ReLU
    acc_ref[...] += jnp.dot(h.astype(jnp.bfloat16), w2_ref[...],
                            preferred_element_type=jnp.float32)        # MXU

    @pl.when(k == pl.num_programs(1) - 1)
    def _():
        o_ref[...] = (acc_ref[...] + b2_ref[...]).astype(o_ref.dtype)


def _select_batch_tile(B: int, prefer_tb: int):
    """Pick a batch tile (multiple of 8) and padded batch size.

    If the whole batch fits in one tile, split it in two so the 'parallel'
    batch axis has >=2 steps and can shard across v7x's two TensorCores.
    """
    Bp8 = _round_up(B, 8)
    if Bp8 <= prefer_tb:
        if Bp8 >= 16:
            tb_eff = _round_up((Bp8 + 1) // 2, 8)
            Bp = 2 * tb_eff
        else:
            tb_eff, Bp = Bp8, Bp8
    else:
        tb_eff = prefer_tb
        Bp = _round_up(B, tb_eff)
    return tb_eff, Bp


def _select_hidden_tile(hp: int, dp: int, tb: int, x_itemsize: int,
                        out_itemsize: int, vmem_limit: int) -> int:
    """Largest hidden-dim tile (multiple of 128, divides hp) fitting the budget."""
    best = 128
    for hk in (128, 256, 512, 1024, 2048, hp):
        if hk > hp or hp % hk != 0:
            continue
        w_bytes = 2 * (dp * hk * 2 + hk * dp * 2)          # w1/w2 chunks, double-buffered bf16
        b_bytes = 2 * hk * 4 + dp * 4                      # b1 chunk (dbl-buf) + b2
        act_bytes = 2 * tb * dp * (x_itemsize + out_itemsize)  # x/out tiles, double-buffered
        acc_bytes = tb * dp * 4
        tmp_bytes = tb * hk * 6 + tb * dp * 4              # f32 h + bf16 h + f32 partial
        if w_bytes + b_bytes + act_bytes + acc_bytes + tmp_bytes <= int(vmem_limit * 0.75):
            best = hk
    return best


def reduced_linear_layer(x, params: PreparedParams, *, out_dtype=None, prefer_tb=None):
    """relu(x @ w1 + b1) @ w2 + b2 using pre-padded bf16 params."""
    B, d = x.shape
    if d != params.d:
        raise ValueError(f"x feature dim {d} != prepared d {params.d}")
    out_dtype = out_dtype or x.dtype
    dp, hp = params.w1p.shape

    vmem_phys = _tpu_vmem_bytes()
    vmem_limit = int(vmem_phys * 0.80)       # headroom for Mosaic scratch / temporaries
    if prefer_tb is None:
        # 512 where 128 MiB VMEM gives room (v5e/v6e); 256 on v7x (64 MiB).
        prefer_tb = 512 if vmem_phys >= 100 * 1024 * 1024 else 256

    tb_eff, Bp = _select_batch_tile(B, prefer_tb)
    x_itemsize = jnp.dtype(x.dtype).itemsize
    out_itemsize = jnp.dtype(out_dtype).itemsize
    hk = _select_hidden_tile(hp, dp, tb_eff, x_itemsize, out_itemsize, vmem_limit)

    n_b = Bp // tb_eff
    n_k = hp // hk

    # Only pad activations when actually needed (no per-call bf16 copy of x).
    need_pad = (Bp != B) or (dp != d)
    if need_pad:
        xin = jnp.zeros((Bp, dp), x.dtype).at[:B, :d].set(x)
    else:
        xin = x

    cost = pl.CostEstimate(
        flops=2 * Bp * dp * hp + 2 * Bp * hp * dp,
        transcendentals=0,
        bytes_accessed=(Bp * dp * x_itemsize
                        + params.w1p.size * 2 + params.w2p.size * 2
                        + params.b1p.size * 4 + params.b2p.size * 4
                        + Bp * dp * out_itemsize),
    )

    out_p = pl.pallas_call(
        mlp_kernel,
        out_shape=jax.ShapeDtypeStruct((Bp, dp), out_dtype),
        grid_spec=pltpu.PrefetchScalarGridSpec(
            num_scalar_prefetch=0,
            grid=(n_b, n_k),                                   # reduction (hidden) axis last
            in_specs=[
                pl.BlockSpec((tb_eff, dp), lambda i, k: (i, 0)),   # x tile (constant over k)
                pl.BlockSpec((dp, hk), lambda i, k: (0, k)),       # w1 hidden chunk
                pl.BlockSpec((1, hk), lambda i, k: (0, k)),        # b1 hidden chunk
                pl.BlockSpec((hk, dp), lambda i, k: (k, 0)),       # w2 hidden chunk
                pl.BlockSpec((1, dp), lambda i, k: (0, 0)),        # b2 (constant)
            ],
            out_specs=pl.BlockSpec((tb_eff, dp), lambda i, k: (i, 0)),
            scratch_shapes=[pltpu.VMEM((tb_eff, dp), jnp.float32)],  # f32 accumulator
        ),
        compiler_params=pltpu.CompilerParams(
            dimension_semantics=("parallel", "arbitrary"),     # megacore-shard batch axis
            vmem_limit_bytes=vmem_limit,
        ),
        cost_estimate=cost,
        # TODO(synk): for very large d (output dim), also tile dp with a third grid
        # axis so the accumulator / x tile stay bounded on v7x.
    )(xin, params.w1p, params.b1p, params.w2p, params.b2p)

    if need_pad:
        return out_p[:B, :d]
    return out_p


if __name__ == "__main__":
    # Small shapes consistent with the module: d=32, d_hidden=64, batch=16.
    B, d, d_hidden = 16, 32, 64

    key = jax.random.PRNGKey(0)
    kx, k1, kb1, k2, kb2 = jax.random.split(key, 5)

    x = jax.random.normal(kx, (B, d), dtype=jnp.float32)

    # PyTorch parameter shapes: l1.weight (d_hidden, d), l2.weight (d, d_hidden);
    # stored transposed for the row-major matmuls in the kernel.
    w1 = (jax.random.normal(k1, (d_hidden, d), dtype=jnp.float32) * 0.1).T   # (d, d_hidden)
    b1 = jax.random.normal(kb1, (d_hidden,), dtype=jnp.float32) * 0.1
    w2 = (jax.random.normal(k2, (d, d_hidden), dtype=jnp.float32) * 0.1).T   # (d_hidden, d)
    b2 = jax.random.normal(kb2, (d,), dtype=jnp.float32) * 0.1

    # One-time parameter preparation (pad + bf16 cast) -- hoisted out of the call path.
    params = prepare_params(w1, b1, w2, b2)

    out = reduced_linear_layer(x, params)
    out = jax.block_until_ready(out)
    assert out.shape == (B, d)

    # Reference 1: bf16-faithful (same operand casts as the kernel) -> tight check.
    xb = x.astype(jnp.bfloat16).astype(jnp.float32)
    w1b = w1.astype(jnp.bfloat16).astype(jnp.float32)
    w2b = w2.astype(jnp.bfloat16).astype(jnp.float32)
    h_ref = jnp.maximum(xb @ w1b + b1, 0.0)
    ref_bf16 = h_ref.astype(jnp.bfloat16).astype(jnp.float32) @ w2b + b2
    assert jnp.allclose(out, ref_bf16, atol=1e-2, rtol=1e-2), "mismatch vs bf16 reference"

    # Reference 2: pure f32 math -> loose sanity check (bf16 operand rounding).
    ref_f32 = jnp.maximum(x @ w1 + b1, 0.0) @ w2 + b2
    assert jnp.allclose(out, ref_f32, atol=5e-2, rtol=5e-2), "mismatch vs f32 reference"

    print("KERNEL_OK")
</pallas_src>

<mosaic_0001>
module attributes {stable_mosaic.version = 11 : i64} {
  func.func @mlp_kernel(%arg0: i32, %arg1: i32, %arg2: memref<8x128xf32, #tpu.memory_space<vmem>>, %arg3: memref<128x128xbf16, #tpu.memory_space<vmem>>, %arg4: memref<1x128xf32, #tpu.memory_space<vmem>>, %arg5: memref<128x128xbf16, #tpu.memory_space<vmem>>, %arg6: memref<1x128xf32, #tpu.memory_space<vmem>>, %arg7: memref<8x128xf32, #tpu.memory_space<vmem>>, %arg8: memref<8x128xf32, #tpu.memory_space<vmem>>) attributes {dimension_semantics = [#tpu.dimension_semantics<parallel>, #tpu.dimension_semantics<arbitrary>], iteration_bounds = array<i64: 2, 1>, scalar_prefetch = 0 : i64, scratch_operands = 1 : i64, tpu.core_type = #tpu.core_type<tc>, window_params = [{transform_indices = @transform_0, window_bounds = array<i64: 8, 128>}, {transform_indices = @transform_1, window_bounds = array<i64: 128, 128>}, {transform_indices = @transform_2, window_bounds = array<i64: 1, 128>}, {transform_indices = @transform_3, window_bounds = array<i64: 128, 128>}, {pipeline_mode = #tpu.pipeline_mode<synchronous>, transform_indices = @transform_4, window_bounds = array<i64: 1, 128>}, {transform_indices = @transform_5, window_bounds = array<i64: 8, 128>}]} {
    %c0_i32 = arith.constant 0 : i32
    %0 = arith.cmpi eq, %arg1, %c0_i32 : i32
    %1 = arith.extui %0 : i1 to i32
    %c0_i32_0 = arith.constant 0 : i32
    %2 = arith.cmpi ne, %1, %c0_i32_0 : i32
    scf.if %2 {
      %cst_16 = arith.constant 0.000000e+00 : f32
      %21 = vector.broadcast %cst_16 : f32 to vector<8x128xf32>
      %c0_17 = arith.constant 0 : index
      %c0_18 = arith.constant 0 : index
      %22 = vector.load %arg8[%c0_17, %c0_18] : memref<8x128xf32, #tpu.memory_space<vmem>>, vector<8x128xf32>
      tpu.vector_store %arg8[%c0_17, %c0_18], %21 {strides = array<i32>} : memref<8x128xf32, #tpu.memory_space<vmem>>, vector<8x128xf32>,
    } else {
    }
    %c0 = arith.constant 0 : index
    %c0_1 = arith.constant 0 : index
    %3 = vector.load %arg2[%c0, %c0_1] : memref<8x128xf32, #tpu.memory_space<vmem>>, vector<8x128xf32>
    %4 = arith.truncf %3 : vector<8x128xf32> to vector<8x128xbf16>
    %c0_2 = arith.constant 0 : index
    %c0_3 = arith.constant 0 : index
    %5 = vector.load %arg3[%c0_2, %c0_3] : memref<128x128xbf16, #tpu.memory_space<vmem>>, vector<128x128xbf16>
    %cst = arith.constant dense<0.000000e+00> : vector<8x128xf32>
    %6 = tpu.matmul %4, %5, %cst {dimension_numbers = #tpu.dot_dimension_numbers<[1], [0], [0], [1], [0, 0, 1, 1], [], []>} : vector<8x128xbf16>, vector<128x128xbf16>, vector<8x128xf32> -> vector<8x128xf32>
    %c0_4 = arith.constant 0 : index
    %c0_5 = arith.constant 0 : index
    %7 = vector.load %arg4[%c0_4, %c0_5] : memref<1x128xf32, #tpu.memory_space<vmem>>, vector<1x128xf32>
    %8 = vector.broadcast %7 : vector<1x128xf32> to vector<8x128xf32>
    %9 = arith.addf %6, %8 : vector<8x128xf32>
    %cst_6 = arith.constant 0.000000e+00 : f32
    %10 = vector.broadcast %cst_6 : f32 to vector<8x128xf32>
    %11 = arith.maximumf %9, %10 : vector<8x128xf32>
    %c0_7 = arith.constant 0 : index
    %c0_8 = arith.constant 0 : index
    %12 = vector.load %arg8[%c0_7, %c0_8] : memref<8x128xf32, #tpu.memory_space<vmem>>, vector<8x128xf32>
    %13 = arith.truncf %11 : vector<8x128xf32> to vector<8x128xbf16>
    %c0_9 = arith.constant 0 : index
    %c0_10 = arith.constant 0 : index
    %14 = vector.load %arg5[%c0_9, %c0_10] : memref<128x128xbf16, #tpu.memory_space<vmem>>, vector<128x128xbf16>
    %cst_11 = arith.constant dense<0.000000e+00> : vector<8x128xf32>
    %15 = tpu.matmul %13, %14, %cst_11 {dimension_numbers = #tpu.dot_dimension_numbers<[1], [0], [0], [1], [0, 0, 1, 1], [], []>} : vector<8x128xbf16>, vector<128x128xbf16>, vector<8x128xf32> -> vector<8x128xf32>
    %16 = arith.addf %12, %15 : vector<8x128xf32>
    %c0_12 = arith.constant 0 : index
    %c0_13 = arith.constant 0 : index
    %17 = vector.load %arg8[%c0_12, %c0_13] : memref<8x128xf32, #tpu.memory_space<vmem>>, vector<8x128xf32>
    tpu.vector_store %arg8[%c0_12, %c0_13], %16 {strides = array<i32>} : memref<8x128xf32, #tpu.memory_space<vmem>>, vector<8x128xf32>,
    %c0_i32_14 = arith.constant 0 : i32
    %18 = arith.cmpi eq, %arg1, %c0_i32_14 : i32
    %19 = arith.extui %18 : i1 to i32
    %c0_i32_15 = arith.constant 0 : i32
    %20 = arith.cmpi ne, %19, %c0_i32_15 : i32
    scf.if %20 {
      %c0_16 = arith.constant 0 : index
      %c0_17 = arith.constant 0 : index
      %21 = vector.load %arg8[%c0_16, %c0_17] : memref<8x128xf32, #tpu.memory_space<vmem>>, vector<8x128xf32>
      %c0_18 = arith.constant 0 : index
      %c0_19 = arith.constant 0 : index
      %22 = vector.load %arg6[%c0_18, %c0_19] : memref<1x128xf32, #tpu.memory_space<vmem>>, vector<1x128xf32>
      %23 = vector.broadcast %22 : vector<1x128xf32> to vector<8x128xf32>
      %24 = arith.addf %21, %23 : vector<8x128xf32>
      %c0_20 = arith.constant 0 : index
      %c0_21 = arith.constant 0 : index
      %25 = vector.load %arg7[%c0_20, %c0_21] : memref<8x128xf32, #tpu.memory_space<vmem>>, vector<8x128xf32>
      tpu.vector_store %arg7[%c0_20, %c0_21], %24 {strides = array<i32>} : memref<8x128xf32, #tpu.memory_space<vmem>>, vector<8x128xf32>,
    } else {
    }
    return
  }
  func.func @transform_0(%arg0: i32, %arg1: i32) -> (i32, i32) {
    %c0_i32 = arith.constant 0 : i32
    %c0_i32_0 = arith.constant 0 : i32
    return %arg0, %c0_i32 : i32, i32
  }
  func.func @transform_1(%arg0: i32, %arg1: i32) -> (i32, i32) {
    %c0_i32 = arith.constant 0 : i32
    %c0_i32_0 = arith.constant 0 : i32
    return %c0_i32, %arg1 : i32, i32
  }
  func.func @transform_2(%arg0: i32, %arg1: i32) -> (i32, i32) {
    %c0_i32 = arith.constant 0 : i32
    %c0_i32_0 = arith.constant 0 : i32
    return %c0_i32, %arg1 : i32, i32
  }
  func.func @transform_3(%arg0: i32, %arg1: i32) -> (i32, i32) {
    %c0_i32 = arith.constant 0 : i32
    %c0_i32_0 = arith.constant 0 : i32
    return %arg1, %c0_i32 : i32, i32
  }
  func.func @transform_4(%arg0: i32, %arg1: i32) -> (i32, i32) {
    %c0_i32 = arith.constant 0 : i32
    %c0_i32_0 = arith.constant 0 : i32
    %c0_i32_1 = arith.constant 0 : i32
    return %c0_i32, %c0_i32_0 : i32, i32
  }
  func.func @transform_5(%arg0: i32, %arg1: i32) -> (i32, i32) {
    %c0_i32 = arith.constant 0 : i32
    %c0_i32_0 = arith.constant 0 : i32
    return %arg0, %c0_i32 : i32, i32
  }
}

</mosaic_0001>

<llo_original>
// kernel: tpu_custom_call.1
$region0: #{tpu_custom_call.1}
  #allocation0 [shape = 'u32[]', space=smem, size = 0x4, offset = 0x4, fixed_abs, tag = 'smem constant byte address 0x4 - core index']
  #allocation1 [shape = 'u32[144,128]{1,0:T(1,128)}', space=vmem, size = 0x12000, scoped, tag = 'internal scratch']
  #allocation2 [shape = 'f32[8,128]{1,0:T(8,128)}', space=vmem, size = 0x1000, scoped, tag = 'scratch operand']
  %s0 = inlined_call_operand.hbm [shape: f32[16,128], index: 0, kind: input, shape index: {}]
  %s1 = inlined_call_operand.hbm [shape: bf16[128,128], index: 1, kind: input, shape index: {}]
  %s2 = inlined_call_operand.vmem [shape: f32[1,128], index: 2, kind: input, shape index: {}]
  %s3 = inlined_call_operand.hbm [shape: bf16[128,128], index: 3, kind: input, shape index: {}]
  %s4 = inlined_call_operand.vmem [shape: f32[1,128], index: 4, kind: input, shape index: {}]
  %s5 = inlined_call_operand.hbm [shape: f32[16,128], index: 5, kind: output, shape index: {}]
  %s6 = sld [smem:[#allocation0]]
  $region73: #{tpu_custom_call.1} parent=0
    _
  %s8 = ssub.s32 1, %s6
  %s9 = scalar_select 0, %s8, %s6
  $region1: #{tpu_custom_call.1} parent=0
    #allocation3 [shape = 'u8[8192]{0}', space=vmem, size = 0x2000, scoped, tag = 'input window, operand 0']
    #allocation4 [shape = 's32[2]{0}', space=sflag, size = 0x8, scoped, tag = 'scoped memory for tpu_custom_call.1']
    #allocation5 [shape = 's32[2]{0}', space=sflag, size = 0x8, scoped, tag = 'scoped memory for tpu_custom_call.1']
    #allocation6 [shape = 'u8[32768]{0}', space=vmem, size = 0x8000, scoped, tag = 'input window, operand 1, single buffered']
    #allocation7 [shape = 's32[1]{0}', space=sflag, size = 0x4, scoped, tag = 'scoped memory for tpu_custom_call.1']
    #allocation8 [shape = 'u8[32768]{0}', space=vmem, size = 0x8000, scoped, tag = 'input window, operand 3, single buffered']
    #allocation9 [shape = 'u8[8192]{0}', space=vmem, size = 0x2000, scoped, tag = 'output window, operand 0']
    %10 = vsyncpa [#allocation4], 0
    %s11 = scalar_lea.sflag [#allocation4], 1
    %12 = vsyncpa %s11, 0
    %13 = vsyncpa [#allocation7], 0
    %14 = vsyncpa [#allocation5], 0
    %s15 = scalar_lea.sflag [#allocation5], 1
    %16 = vsyncpa %s15, 0
    loop: start=0, step=1, limit=4
    $region2: #{tpu_custom_call.1} parent=1 // loop_pre_header
      _
    $region3: #{tpu_custom_call.1} parent=1 // loop_header
      %s18 = sphi 0, %s22
      %p19 = scmp.ge.s32.totalorder %s18, 4
      %s25 = sphi 0, %s37
      %s26 = sphi 0, %s33
      %s27 = sphi 0, %s25
      %s28 = sphi 0, %s26
      %s29 = sphi 0, %s27
      %s30 = sphi 0, %s28
      %s40 = sphi 0, %s42
      %s43 = sphi 0, %s40
      %s44 = sphi 0, %s43
      %s60 = sphi 0, %s44
      %s66 = sphi 0, %s68
      %s69 = sphi 0, %s66
      %s70 = sphi 0, %s69
      %s86 = sphi 0, %s70
      %s92 = sphi 0, %s94
      %s95 = sphi 0, %s92
      %s96 = sphi 0, %s95
      %s112 = sphi 0, %s96
      %s118 = sphi 0, %s120
      %s121 = sphi 0, %s118
      %s122 = sphi 0, %s121
      %s138 = sphi 0, %s122
      %s142 = sphi 0, %s142
      %s144 = sphi 0, %s142
      %s145 = sphi 0, %s144
      %s159 = sphi 0, %s145
      %s165 = sphi 0, %s167
      %s168 = sphi 0, %s165
      %s169 = sphi 0, %s168
      %s185 = sphi 0, %s169
    $region4: #{tpu_custom_call.1} parent=1 // loop_header_branch
      %21 = sbr.rel (%p19) target = $region8
    $region5: #{tpu_custom_call.1} parent=1 // loop_body
      %s23 = ssub.s32 %s18, 1
      %s24 = ssub.s32 %s18, 2
      %s31 = sadd.s32 1, %s26
      %p32 = scmp.ge.s32.totalorder %s31, 1
      %s33 = scalar_select %p32, 0, %s31
      %s34 = sadd.s32 1, %s25
      %s35 = scalar_select %p32, %s34, %s25
      %p36 = scmp.ge.s32.totalorder %s35, 2
      %s37 = scalar_select %p36, 0, %s35
      %s38 = ssub.s32 %s25, %s37
      %p39 = scmp.eq.s32.totalorder %s38, 0
      %s41 = sadd.s32 %s40, 1
      %s42 = scalar_select %p39, %s40, %s41
      %p45 = pneg %p39
      %p46 = scmp.eq.s32.totalorder %s18, 1
      %p47 = por %p45, %p46
      %p48 = scmp.ne.s32.totalorder %s40, %s43
      %p49 = scmp.eq.s32.totalorder %s18, 0
      %p50 = por %p48, %p49
      %p51 = scmp.ne.s32.totalorder %s40, %s43
      %p52 = scmp.eq.s32.totalorder %s23, 1
      %p53 = por %p51, %p52
      %p54 = scmp.ne.s32.totalorder %s43, %s44
      %p55 = scmp.eq.s32.totalorder %s23, 0
      %p56 = por %p54, %p55
      %p57 = scmp.ne.s32.totalorder %s43, %s44
      %p58 = scmp.eq.s32.totalorder %s24, 1
      %p59 = por %p57, %p58
      %p61 = scmp.ne.s32.totalorder %s44, %s60
      %p62 = scmp.eq.s32.totalorder %s24, 0
      %p63 = por %p61, %p62
      %s64 = ssub.s32 %s26, %s33
      %p65 = scmp.eq.s32.totalorder %s64, 0
      %s67 = sadd.s32 %s66, 1
      %s68 = scalar_select %p65, %s66, %s67
      %p71 = pneg %p65
      %p72 = scmp.eq.s32.totalorder %s18, 1
      %p73 = por %p71, %p72
      %p74 = scmp.ne.s32.totalorder %s66, %s69
      %p75 = scmp.eq.s32.totalorder %s18, 0
      %p76 = por %p74, %p75
      %p77 = scmp.ne.s32.totalorder %s66, %s69
      %p78 = scmp.eq.s32.totalorder %s23, 1
      %p79 = por %p77, %p78
      %p80 = scmp.ne.s32.totalorder %s69, %s70
      %p81 = scmp.eq.s32.totalorder %s23, 0
      %p82 = por %p80, %p81
      %p83 = scmp.ne.s32.totalorder %s69, %s70
      %p84 = scmp.eq.s32.totalorder %s24, 1
      %p85 = por %p83, %p84
      %p87 = scmp.ne.s32.totalorder %s70, %s86
      %p88 = scmp.eq.s32.totalorder %s24, 0
      %p89 = por %p87, %p88
      %s90 = ssub.s32 %s26, %s33
      %p91 = scmp.eq.s32.totalorder %s90, 0
      %s93 = sadd.s32 %s92, 1
      %s94 = scalar_select %p91, %s92, %s93
      %p97 = pneg %p91
      %p98 = scmp.eq.s32.totalorder %s18, 1
      %p99 = por %p97, %p98
      %p100 = scmp.ne.s32.totalorder %s92, %s95
      %p101 = scmp.eq.s32.totalorder %s18, 0
      %p102 = por %p100, %p101
      %p103 = scmp.ne.s32.totalorder %s92, %s95
      %p104 = scmp.eq.s32.totalorder %s23, 1
      %p105 = por %p103, %p104
      %p106 = scmp.ne.s32.totalorder %s95, %s96
      %p107 = scmp.eq.s32.totalorder %s23, 0
      %p108 = por %p106, %p107
      %p109 = scmp.ne.s32.totalorder %s95, %s96
      %p110 = scmp.eq.s32.totalorder %s24, 1
      %p111 = por %p109, %p110
      %p113 = scmp.ne.s32.totalorder %s96, %s112
      %p114 = scmp.eq.s32.totalorder %s24, 0
      %p115 = por %p113, %p114
      %s116 = ssub.s32 %s26, %s33
      %p117 = scmp.eq.s32.totalorder %s116, 0
      %s119 = sadd.s32 %s118, 1
      %s120 = scalar_select %p117, %s118, %s119
      %p123 = pneg %p117
      %p124 = scmp.eq.s32.totalorder %s18, 1
      %p125 = por %p123, %p124
      %p126 = scmp.ne.s32.totalorder %s118, %s121
      %p127 = scmp.eq.s32.totalorder %s18, 0
      %p128 = por %p126, %p127
      %p129 = scmp.ne.s32.totalorder %s118, %s121
      %p130 = scmp.eq.s32.totalorder %s23, 1
      %p131 = por %p129, %p130
      %p132 = scmp.ne.s32.totalorder %s121, %s122
      %p133 = scmp.eq.s32.totalorder %s23, 0
      %p134 = por %p132, %p133
      %p135 = scmp.ne.s32.totalorder %s121, %s122
      %p136 = scmp.eq.s32.totalorder %s24, 1
      %p137 = por %p135, %p136
      %p139 = scmp.ne.s32.totalorder %s122, %s138
      %p140 = scmp.eq.s32.totalorder %s24, 0
      %p141 = por %p139, %p140
      %s143 = sadd.s32 %s142, 1
      %p146 = scmp.eq.s32.totalorder %s18, 1
      %p147 = scmp.ne.s32.totalorder %s142, %s144
      %p148 = scmp.eq.s32.totalorder %s18, 0
      %p149 = por %p147, %p148
      %p150 = scmp.ne.s32.totalorder %s142, %s144
      %p151 = scmp.eq.s32.totalorder %s23, 1
      %p152 = por %p150, %p151
      %p153 = scmp.ne.s32.totalorder %s144, %s145
      %p154 = scmp.eq.s32.totalorder %s23, 0
      %p155 = por %p153, %p154
      %p156 = scmp.ne.s32.totalorder %s144, %s145
      %p157 = scmp.eq.s32.totalorder %s24, 1
      %p158 = por %p156, %p157
      %p160 = scmp.ne.s32.totalorder %s145, %s159
      %p161 = scmp.eq.s32.totalorder %s24, 0
      %p162 = por %p160, %p161
      %s163 = ssub.s32 %s25, %s37
      %p164 = scmp.eq.s32.totalorder %s163, 0
      %s166 = sadd.s32 %s165, 1
      %s167 = scalar_select %p164, %s165, %s166
      %p170 = pneg %p164
      %p171 = scmp.eq.s32.totalorder %s18, 1
      %p172 = por %p170, %p171
      %p173 = scmp.ne.s32.totalorder %s165, %s168
      %p174 = scmp.eq.s32.totalorder %s18, 0
      %p175 = por %p173, %p174
      %p176 = scmp.ne.s32.totalorder %s165, %s168
      %p177 = scmp.eq.s32.totalorder %s23, 1
      %p178 = por %p176, %p177
      %p179 = scmp.ne.s32.totalorder %s168, %s169
      %p180 = scmp.eq.s32.totalorder %s23, 0
      %p181 = por %p179, %p180
      %p182 = scmp.ne.s32.totalorder %s168, %s169
      %p183 = scmp.eq.s32.totalorder %s24, 1
      %p184 = por %p182, %p183
      %p186 = scmp.ne.s32.totalorder %s169, %s185
      %p187 = scmp.eq.s32.totalorder %s24, 0
      %p188 = por %p186, %p187
      %p189 = scmp.le.s32.totalorder 1, %s18
      %p190 = scmp.lt.s32.totalorder %s18, 3
      %p191 = pnand %p189, %p190
      %p192 = pneg %p191
      // Predicated region
      $region9: #{tpu_custom_call.1} parent=5 // pred_check
        _
      $region10: #{tpu_custom_call.1} parent=5 // pred_check_branch
        %194 = sbr.rel (%p191) target = $region12
      $region11: #{tpu_custom_call.1} parent=5 // pred_region
        %s195 = ssub.s32 %s18, 1
        // Predicated region
        $region13: #{tpu_custom_call.1} parent=11 // pred_check
          %p196 = pneg %p82
        $region14: #{tpu_custom_call.1} parent=11 // pred_check_branch
          %198 = sbr.rel (%p196) target = $region16
        $region15: #{tpu_custom_call.1} parent=11 // pred_region
          %s200 = ssub.s32 1024, 1024
          %201 = vsyncadd [#allocation7], %s200
          %s202 = smul.addr %s28, 64
          %s203 = scalar_lea.hbm %s1, %s202
          %s204 = sshll.u32 [#allocation6], 4
          %s205 = int_to_ptr.vmem [resolvable:$true] %s204
          %210 = dma.hbm_to_vmem [thread:$0]  %s203, 1024, %s205, [#allocation7], 64, 64, 4
        $region16: #{tpu_custom_call.1} parent=11 // pred_fallthru
          _
        // Predicated region
        $region17: #{tpu_custom_call.1} parent=11 // pred_check
          %p211 = pneg %p108
        $region18: #{tpu_custom_call.1} parent=11 // pred_check_branch
          %213 = sbr.rel (%p211) target = $region20
        $region19: #{tpu_custom_call.1} parent=11 // pred_region
          %p214 = scmp.lt.s32.totalorder %s28, 0
          %s215 = scalar_select %p214, %s28, 0
          %s216 = scalar_lea.vmem %s2, %s215
        $region20: #{tpu_custom_call.1} parent=11 // pred_fallthru
          _
        // Predicated region
        $region21: #{tpu_custom_call.1} parent=11 // pred_check
          %p217 = pneg %p134
        $region22: #{tpu_custom_call.1} parent=11 // pred_check_branch
          %219 = sbr.rel (%p217) target = $region24
        $region23: #{tpu_custom_call.1} parent=11 // pred_region
          %s220 = smul.u32 16, %s28
          %s222 = ssub.s32 1024, 1024
          %223 = vsyncadd [#allocation7], %s222
          %s224 = smul.addr %s220, 64
          %s225 = scalar_lea.hbm %s3, %s224
          %s226 = sshll.u32 [#allocation8], 4
          %s227 = int_to_ptr.vmem [resolvable:$true] %s226
          %232 = dma.hbm_to_vmem [thread:$0]  %s225, 1024, %s227, [#allocation7], 64, 64, 4
        $region24: #{tpu_custom_call.1} parent=11 // pred_fallthru
          _
        // Predicated region
        $region25: #{tpu_custom_call.1} parent=11 // pred_check
          %p233 = pneg %p155
        $region26: #{tpu_custom_call.1} parent=11 // pred_check_branch
          %235 = sbr.rel (%p233) target = $region28
        $region27: #{tpu_custom_call.1} parent=11 // pred_region
          _
        $region28: #{tpu_custom_call.1} parent=11 // pred_fallthru
          _
      $region12: #{tpu_custom_call.1} parent=5 // pred_fallthru
        _
      %p236 = scmp.lt.s32.totalorder %s18, 2
      // Predicated region
      $region29: #{tpu_custom_call.1} parent=5 // pred_check
        %p237 = pneg %p236
      $region30: #{tpu_custom_call.1} parent=5 // pred_check_branch
        %239 = sbr.rel (%p237) target = $region32
      $region31: #{tpu_custom_call.1} parent=5 // pred_region
        // Predicated region
        $region33: #{tpu_custom_call.1} parent=31 // pred_check
          %p240 = pneg %p50
        $region34: #{tpu_custom_call.1} parent=31 // pred_check_branch
          %242 = sbr.rel (%p240) target = $region36
        $region35: #{tpu_custom_call.1} parent=31 // pred_region
          %s243 = sand.u32 %s40, 1
          %s244 = scalar_lea.sflag [#allocation4], %s243
          %s245 = sand.u32 %s40, 1
          %s246 = smul.addr %s245, 8
          %s247 = scalar_lea.vmem [#allocation3], %s246
          %s249 = ssub.s32 128, 128
          %250 = vsyncadd %s244, %s249
          %s251 = smul.addr %s25, 128
          %s252 = scalar_lea.hbm %s0, %s251
          %s254 = sshll.u32 %s247, 4
          %s255 = int_to_ptr.vmem [resolvable:$true] %s254
          %257 = dma.hbm_to_vmem [thread:$0]  %s252, 128, %s255, %s244
        $region36: #{tpu_custom_call.1} parent=31 // pred_fallthru
          _
      $region32: #{tpu_custom_call.1} parent=5 // pred_fallthru
        _
      %p258 = scmp.le.s32.totalorder 1, %s18
      %p259 = scmp.lt.s32.totalorder %s18, 3
      %p260 = pnand %p258, %p259
      %p261 = pneg %p260
      // Predicated region
      $region37: #{tpu_custom_call.1} parent=5 // pred_check
        _
      $region38: #{tpu_custom_call.1} parent=5 // pred_check_branch
        %263 = sbr.rel (%p260) target = $region40
      $region39: #{tpu_custom_call.1} parent=5 // pred_region
        %s264 = ssub.s32 %s18, 1
        %s265 = sand.u32 %s43, 1
        %s266 = scalar_lea.sflag [#allocation4], %s265
        %s267 = sand.u32 %s43, 1
        %s268 = smul.addr %s267, 8
        %s269 = scalar_lea.vmem [#allocation3], %s268
        // Predicated region
        $region41: #{tpu_custom_call.1} parent=39 // pred_check
          %p270 = pneg %p56
        $region42: #{tpu_custom_call.1} parent=39 // pred_check_branch
          %272 = sbr.rel (%p270) target = $region44
        $region43: #{tpu_custom_call.1} parent=39 // pred_region
          %273 = dma.done %s266, 128
        $region44: #{tpu_custom_call.1} parent=39 // pred_fallthru
          _
        // Predicated region
        $region45: #{tpu_custom_call.1} parent=39 // pred_check
          %p274 = pneg %p82
        $region46: #{tpu_custom_call.1} parent=39 // pred_check_branch
          %276 = sbr.rel (%p274) target = $region48
        $region47: #{tpu_custom_call.1} parent=39 // pred_region
          %277 = dma.done [#allocation7], 1024
        $region48: #{tpu_custom_call.1} parent=39 // pred_fallthru
          _
        // Predicated region
        $region49: #{tpu_custom_call.1} parent=39 // pred_check
          %p278 = pneg %p134
        $region50: #{tpu_custom_call.1} parent=39 // pred_check_branch
          %280 = sbr.rel (%p278) target = $region52
        $region51: #{tpu_custom_call.1} parent=39 // pred_region
          %281 = dma.done [#allocation7], 1024
        $region52: #{tpu_custom_call.1} parent=39 // pred_fallthru
          _
        %s282 = sand.u32 %s43, 1
        %s283 = scalar_lea.sflag [#allocation4], %s282
        %s284 = sand.u32 %s43, 1
        %s285 = smul.addr %s284, 8
        %s286 = scalar_lea.vmem [#allocation3], %s285
        %p287 = pneg %p56
        %p288 = pneg %p53
        %p289 = pneg %p82
        %p290 = pneg %p79
        %p291 = scmp.lt.s32.totalorder %s28, 0
        %s292 = scalar_select %p291, %s28, 0
        %s293 = scalar_lea.vmem %s2, %s292
        %p294 = pneg %p108
        %p295 = pneg %p105
        %p296 = pneg %p134
        %p297 = pneg %p131
        %p298 = pneg %p155
        %p299 = pneg %p152
        %p300 = pneg %p181
        %p301 = pneg %p178
        %s302 = sand.u32 %s168, 1
        %s303 = scalar_lea.sflag [#allocation5], %s302
        %s304 = sand.u32 %s168, 1
        %s305 = smul.addr %s304, 8
        %s306 = scalar_lea.vmem [#allocation9], %s305
        %p307 = scmp.lt.s32.totalorder %s28, 0
        %s308 = scalar_select %p307, %s28, 0
        %s309 = scalar_lea.vmem %s2, %s308
        %s310 = smul.u32 16, %s28
        %p312 = scmp.eq.s32.totalorder %s28, 0
        // Predicated region
        $region53: #{tpu_custom_call.1} parent=39 // pred_check
          %p313 = pneg %p312
        $region54: #{tpu_custom_call.1} parent=39 // pred_check_branch
          %315 = sbr.rel (%p313) target = $region56
        $region55: #{tpu_custom_call.1} parent=39 // pred_region
          %316 = vst [vmem:[#allocation2] sm:$0xff] 0.0
        $region56: #{tpu_custom_call.1} parent=39 // pred_fallthru
          _
        %v317 = vld [vmem:[%s269] sm:$0xff]
        %v318 = vpack.c.bf16 %v317, %v317
        %v319 = vld [vmem:[#allocation6] sm:$0xf]
        %v320 = vld [vmem:[#allocation6 + $0x4] sm:$0xf]
        %v321 = vld [vmem:[#allocation6 + $0x8] sm:$0xf]
        %v322 = vld [vmem:[#allocation6 + $0xc] sm:$0xf]
        %v323 = vld [vmem:[#allocation6 + $0x10] sm:$0xf]
        %v324 = vld [vmem:[#allocation6 + $0x14] sm:$0xf]
        %v325 = vld [vmem:[#allocation6 + $0x18] sm:$0xf]
        %v326 = vld [vmem:[#allocation6 + $0x1c] sm:$0xf]
        %v327 = vld [vmem:[#allocation6 + $0x20] sm:$0xf]
        %v328 = vld [vmem:[#allocation6 + $0x24] sm:$0xf]
        %v329 = vld [vmem:[#allocation6 + $0x28] sm:$0xf]
        %v330 = vld [vmem:[#allocation6 + $0x2c] sm:$0xf]
        %v331 = vld [vmem:[#allocation6 + $0x30] sm:$0xf]
        %v332 = vld [vmem:[#allocation6 + $0x34] sm:$0xf]
        %v333 = vld [vmem:[#allocation6 + $0x38] sm:$0xf]
        %v334 = vld [vmem:[#allocation6 + $0x3c] sm:$0xf]
        %v335 = vld [vmem:[%s309] sm:$0x1]
        %v337 = vlaneseq
        %v338 = vshrl.u32 %v337, 7
        %v339 = vsub.s32 0, %v338
        %v340 = vrot.slane %v335, %v339
        %v358 = vunpack.c.l.b16 %v319
        %v359 = vunpack.c.l.b16 %v320
        %v360 = vunpack.c.l.b16 %v321
        %v361 = vunpack.c.l.b16 %v322
        %v362 = vunpack.c.l.b16 %v323
        %v363 = vunpack.c.l.b16 %v324
        %v364 = vunpack.c.l.b16 %v325
        %v365 = vunpack.c.l.b16 %v326
        %v366 = vunpack.c.l.b16 %v327
        %v367 = vunpack.c.l.b16 %v328
        %v368 = vunpack.c.l.b16 %v329
        %v369 = vunpack.c.l.b16 %v330
        %v370 = vunpack.c.l.b16 %v331
        %v371 = vunpack.c.l.b16 %v332
        %v372 = vunpack.c.l.b16 %v333
        %v373 = vunpack.c.l.b16 %v334
        %v374 = vpack.c.b16 %v359, %v358
        %v375 = vpack.c.b16 %v361, %v360
        %v376 = vpack.c.b16 %v363, %v362
        %v377 = vpack.c.b16 %v365, %v364
        %v378 = vpack.c.b16 %v367, %v366
        %v379 = vpack.c.b16 %v369, %v368
        %v380 = vpack.c.b16 %v371, %v370
        %v381 = vpack.c.b16 %v373, %v372
        %390 = vmatprep.subr.bf16.mxu0 0
        %391 = vmatpush1.bf16.msra.mxu0 %v374
        %392 = vmatprep.subr.bf16.mxu0 0
        %393 = vmatpush1.bf16.msra.mxu0 %v375
        %394 = vmatprep.subr.bf16.mxu0 0
        %395 = vmatpush1.bf16.msra.mxu0 %v376
        %396 = vmatprep.subr.bf16.mxu0 0
        %397 = vmatpush1.bf16.msra.mxu0 %v377
        %398 = vmatprep.subr.bf16.mxu0 0
        %399 = vmatpush1.bf16.msra.mxu0 %v378
        %400 = vmatprep.subr.bf16.mxu0 0
        %401 = vmatpush1.bf16.msra.mxu0 %v379
        %402 = vmatprep.subr.bf16.mxu0 0
        %403 = vmatpush1.bf16.msra.mxu0 %v380
        %404 = vmatprep.subr.bf16.mxu0 0
        %405 = vmatpush1.bf16.msra.mxu0 %v381
        %406 = vmatprep.subr.bf16.mxu0 0
        %407 = vmatpush1.bf16.msra.mxu0 0
        %408 = vmatprep.subr.bf16.mxu0 0
        %409 = vmatpush1.bf16.msra.mxu0 0
        %410 = vmatprep.subr.bf16.mxu0 0
        %411 = vmatpush1.bf16.msra.mxu0 0
        %412 = vmatprep.subr.bf16.mxu0 0
        %413 = vmatpush1.bf16.msra.mxu0 0
        %414 = vmatprep.subr.bf16.mxu0 0
        %415 = vmatpush1.bf16.msra.mxu0 0
        %416 = vmatprep.subr.bf16.mxu0 0
        %417 = vmatpush1.bf16.msra.mxu0 0
        %418 = vmatprep.subr.bf16.mxu0 0
        %419 = vmatpush1.bf16.msra.mxu0 0
        %420 = vmatprep.subr.bf16.mxu0 0
        %421 = vmatpush1.bf16.msra.mxu0 0
        %422 = vmatprep.mubr.bf16.mxu0 0
        %423 = vmatmul.mubr.bf16.gmra.mrb[0].mxu0 %v318
        %v424 = vpop.f32.mrb[0].mxu0
        %v425 = vadd.f32 %v340, %v424
        %v426 = vpop.f32.mrb[0].mxu0
        %v427 = vpop.f32.mrb[0].mxu0
        %v428 = vpop.f32.mrb[0].mxu0
        %429 = vdwg.mxu0
        %v430 = vmax.f32 %v425, 0.0
        %v431 = vld [vmem:[#allocation2] sm:$0xff]
        %v432 = vpack.c.bf16 %v430, %v430
        %v433 = vld [vmem:[#allocation8] sm:$0xf]
        %v434 = vld [vmem:[#allocation8 + $0x4] sm:$0xf]
        %v435 = vld [vmem:[#allocation8 + $0x8] sm:$0xf]
        %v436 = vld [vmem:[#allocation8 + $0xc] sm:$0xf]
        %v437 = vld [vmem:[#allocation8 + $0x10] sm:$0xf]
        %v438 = vld [vmem:[#allocation8 + $0x14] sm:$0xf]
        %v439 = vld [vmem:[#allocation8 + $0x18] sm:$0xf]
        %v440 = vld [vmem:[#allocation8 + $0x1c] sm:$0xf]
        %v441 = vld [vmem:[#allocation8 + $0x20] sm:$0xf]
        %v442 = vld [vmem:[#allocation8 + $0x24] sm:$0xf]
        %v443 = vld [vmem:[#allocation8 + $0x28] sm:$0xf]
        %v444 = vld [vmem:[#allocation8 + $0x2c] sm:$0xf]
        %v445 = vld [vmem:[#allocation8 + $0x30] sm:$0xf]
        %v446 = vld [vmem:[#allocation8 + $0x34] sm:$0xf]
        %v447 = vld [vmem:[#allocation8 + $0x38] sm:$0xf]
        %v448 = vld [vmem:[#allocation8 + $0x3c] sm:$0xf]
        %v465 = vunpack.c.l.b16 %v433
        %v466 = vunpack.c.l.b16 %v434
        %v467 = vunpack.c.l.b16 %v435
        %v468 = vunpack.c.l.b16 %v436
        %v469 = vunpack.c.l.b16 %v437
        %v470 = vunpack.c.l.b16 %v438
        %v471 = vunpack.c.l.b16 %v439
        %v472 = vunpack.c.l.b16 %v440
        %v473 = vunpack.c.l.b16 %v441
        %v474 = vunpack.c.l.b16 %v442
        %v475 = vunpack.c.l.b16 %v443
        %v476 = vunpack.c.l.b16 %v444
        %v477 = vunpack.c.l.b16 %v445
        %v478 = vunpack.c.l.b16 %v446
        %v479 = vunpack.c.l.b16 %v447
        %v480 = vunpack.c.l.b16 %v448
        %v481 = vpack.c.b16 %v466, %v465
        %v482 = vpack.c.b16 %v468, %v467
        %v483 = vpack.c.b16 %v470, %v469
        %v484 = vpack.c.b16 %v472, %v471
        %v485 = vpack.c.b16 %v474, %v473
        %v486 = vpack.c.b16 %v476, %v475
        %v487 = vpack.c.b16 %v478, %v477
        %v488 = vpack.c.b16 %v480, %v479
        %497 = vmatprep.subr.bf16.mxu0 0
        %498 = vmatpush1.bf16.msra.mxu0 %v481
        %499 = vmatprep.subr.bf16.mxu0 0
        %500 = vmatpush1.bf16.msra.mxu0 %v482
        %501 = vmatprep.subr.bf16.mxu0 0
        %502 = vmatpush1.bf16.msra.mxu0 %v483
        %503 = vmatprep.subr.bf16.mxu0 0
        %504 = vmatpush1.bf16.msra.mxu0 %v484
        %505 = vmatprep.subr.bf16.mxu0 0
        %506 = vmatpush1.bf16.msra.mxu0 %v485
        %507 = vmatprep.subr.bf16.mxu0 0
        %508 = vmatpush1.bf16.msra.mxu0 %v486
        %509 = vmatprep.subr.bf16.mxu0 0
        %510 = vmatpush1.bf16.msra.mxu0 %v487
        %511 = vmatprep.subr.bf16.mxu0 0
        %512 = vmatpush1.bf16.msra.mxu0 %v488
        %513 = vmatprep.subr.bf16.mxu0 0
        %514 = vmatpush1.bf16.msra.mxu0 0
        %515 = vmatprep.subr.bf16.mxu0 0
        %516 = vmatpush1.bf16.msra.mxu0 0
        %517 = vmatprep.subr.bf16.mxu0 0
        %518 = vmatpush1.bf16.msra.mxu0 0
        %519 = vmatprep.subr.bf16.mxu0 0
        %520 = vmatpush1.bf16.msra.mxu0 0
        %521 = vmatprep.subr.bf16.mxu0 0
        %522 = vmatpush1.bf16.msra.mxu0 0
        %523 = vmatprep.subr.bf16.mxu0 0
        %524 = vmatpush1.bf16.msra.mxu0 0
        %525 = vmatprep.subr.bf16.mxu0 0
        %526 = vmatpush1.bf16.msra.mxu0 0
        %527 = vmatprep.subr.bf16.mxu0 0
        %528 = vmatpush1.bf16.msra.mxu0 0
        %529 = vmatprep.mubr.bf16.mxu0 0
        %530 = vmatmul.mubr.bf16.gmra.mrb[0].mxu0 %v432
        %v531 = vpop.f32.mrb[0].mxu0
        %v532 = vadd.f32 0.0, %v531
        %v533 = vpop.f32.mrb[0].mxu0
        %v534 = vpop.f32.mrb[0].mxu0
        %v535 = vpop.f32.mrb[0].mxu0
        %536 = vdwg.mxu0
        %v537 = vadd.f32 %v431, %v532
        %538 = vst [vmem:[#allocation2] sm:$0xff] %v537
        // Predicated region
        $region57: #{tpu_custom_call.1} parent=39 // pred_check
          %p539 = pneg %p312
        $region58: #{tpu_custom_call.1} parent=39 // pred_check_branch
          %541 = sbr.rel (%p539) target = $region60
        $region59: #{tpu_custom_call.1} parent=39 // pred_region
          %v542 = vld [vmem:[#allocation2] sm:$0xff]
          %v543 = vld [vmem:[%s4] sm:$0x1]
          %v545 = vlaneseq
          %v546 = vshrl.u32 %v545, 7
          %v547 = vsub.s32 0, %v546
          %v548 = vrot.slane %v543, %v547
          %v550 = vadd.f32 %v542, %v548
          %551 = vst [vmem:[%s306] sm:$0xff] %v550
        $region60: #{tpu_custom_call.1} parent=39 // pred_fallthru
          _
        %s552 = sand.u32 %s168, 1
        %s553 = scalar_lea.sflag [#allocation5], %s552
        %s554 = sand.u32 %s168, 1
        %s555 = smul.addr %s554, 8
        %s556 = scalar_lea.vmem [#allocation9], %s555
        // Predicated region
        $region61: #{tpu_custom_call.1} parent=39 // pred_check
          %p557 = pneg %p178
        $region62: #{tpu_custom_call.1} parent=39 // pred_check_branch
          %559 = sbr.rel (%p557) target = $region64
        $region63: #{tpu_custom_call.1} parent=39 // pred_region
          %s561 = ssub.s32 128, 128
          %562 = vsyncadd %s553, %s561
          %s563 = smul.addr %s27, 128
          %s564 = scalar_lea.hbm %s5, %s563
          %s566 = sshll.u32 %s556, 4
          %s567 = int_to_ptr.vmem [resolvable:$true] %s566
          %569 = dma.vmem_to_hbm [thread:$0]  %s567, 128, %s564, %s553
        $region64: #{tpu_custom_call.1} parent=39 // pred_fallthru
          _
      $region40: #{tpu_custom_call.1} parent=5 // pred_fallthru
        _
      %p570 = scmp.le.s32.totalorder 2, %s18
      // Predicated region
      $region65: #{tpu_custom_call.1} parent=5 // pred_check
        %p571 = pneg %p570
      $region66: #{tpu_custom_call.1} parent=5 // pred_check_branch
        %573 = sbr.rel (%p571) target = $region68
      $region67: #{tpu_custom_call.1} parent=5 // pred_region
        %s574 = ssub.s32 %s18, 2
        // Predicated region
        $region69: #{tpu_custom_call.1} parent=67 // pred_check
          %p575 = pneg %p184
        $region70: #{tpu_custom_call.1} parent=67 // pred_check_branch
          %577 = sbr.rel (%p575) target = $region72
        $region71: #{tpu_custom_call.1} parent=67 // pred_region
          %s578 = sand.u32 %s169, 1
          %s579 = scalar_lea.sflag [#allocation5], %s578
          %s580 = sand.u32 %s169, 1
          %s581 = smul.addr %s580, 8
          %s582 = scalar_lea.vmem [#allocation9], %s581
          %583 = dma.done %s579, 128
        $region72: #{tpu_custom_call.1} parent=67 // pred_fallthru
          _
      $region68: #{tpu_custom_call.1} parent=5 // pred_fallthru
        _
    $region6: #{tpu_custom_call.1} parent=1 // loop_footer
      %s22 = sadd.s32 1, %s18
    $region7: #{tpu_custom_call.1} parent=1 // loop_footer_branch
      %17 = sbr.rel target = $region3
    $region8: #{tpu_custom_call.1} parent=1 // loop_exit
      _
    %584 = vsyncpa [#allocation4], 1
    %s585 = scalar_lea.sflag [#allocation4], 1
    %586 = vsyncpa %s585, 1
    %587 = vsyncpa [#allocation7], 1
    %588 = vsyncpa [#allocation5], 1
    %s589 = scalar_lea.sflag [#allocation5], 1
    %590 = vsyncpa %s589, 1

</llo_original>
